<compile_context>
chip_gen: v5e
topology: v5e:2x2
jax: 0.10.0
libtpu: 0.0.40
codegen_flags: <defaults>
</compile_context>

<pallas_src>
import jax
import jax.numpy as jnp
from jax.experimental import pallas as pl
from jax.experimental.pallas import tpu as pltpu

CIFAR_MEAN = [0.4914, 0.4822, 0.4465]
CIFAR_STD = [0.247, 0.2435, 0.2616]


def get_cifar_params(resol, dtype=jnp.float32):
    """Build (1,3,R,R) mean and std planes, matching the PyTorch helper."""
    mean = jnp.stack(
        [jnp.full((resol, resol), CIFAR_MEAN[i], dtype=dtype) for i in range(3)]
    )[None]
    std = jnp.stack(
        [jnp.full((resol, resol), CIFAR_STD[i], dtype=dtype) for i in range(3)]
    )[None]
    return mean, std


def _normalize_kernel(x_ref, std_ref, mean_ref, o_ref):
    # x_ref / o_ref: (n_block, F)   std_ref / mean_ref: (1, F)
    # Pure elementwise FMA on the VPU; (1,F) broadcasts over the sublane dim.
    o_ref[...] = x_ref[...] * std_ref[...] + mean_ref[...]


def _pick_batch_block(n, row_bytes, target_bytes=4 << 20):
    """Largest batch-tile that keeps a block <= ~4 MiB (v7x-safe), multiple of 8
    when it does not cover the full batch (so the (8,128) tiling rule holds)."""
    if n * row_bytes <= target_bytes or n < 8:
        return n
    nb = max(1, target_bytes // row_bytes)
    nb = max(8, (nb // 8) * 8)
    return min(nb, n)


def cifar_in_normalize(x, mean, std):
    """x: (N, C, R, R); mean/std: (1, C, R, R). Returns x * std + mean[0]."""
    N, C, R, _ = x.shape
    F = C * R * R

    # Lane-dense, rank-2 views. Reshapes of contiguous NCHW are layout-free.
    x2 = x.reshape(N, F)
    std_row = std.reshape(1, F).astype(x.dtype)     # per-channel pattern preserved
    mean_row = mean.reshape(1, F).astype(x.dtype)   # == mean[0] flattened

    n_block = _pick_batch_block(N, F * x.dtype.itemsize)
    grid = (pl.cdiv(N, n_block),)

    out2 = pl.pallas_call(
        _normalize_kernel,
        out_shape=jax.ShapeDtypeStruct((N, F), x.dtype),
        grid_spec=pltpu.PrefetchScalarGridSpec(
            num_scalar_prefetch=0,
            grid=grid,
            in_specs=[
                pl.BlockSpec((n_block, F), lambda i: (i, 0)),
                # Constant block index -> fetched once, VMEM-resident all grid steps.
                pl.BlockSpec((1, F), lambda i: (0, 0)),
                pl.BlockSpec((1, F), lambda i: (0, 0)),
            ],
            out_specs=pl.BlockSpec((n_block, F), lambda i: (i, 0)),
        ),
        compiler_params=pltpu.CompilerParams(
            dimension_semantics=("parallel",)
        ),
    )(x2, std_row, mean_row)

    return out2.reshape(N, C, R, R)


if __name__ == "__main__":
    resol = 16
    N, C = 2, 3  # CIFAR has 3 channels

    key = jax.random.PRNGKey(0)
    x = jax.random.normal(key, (N, C, resol, resol), dtype=jnp.float32)

    mean, std = get_cifar_params(resol)

    out = cifar_in_normalize(x, mean, std)
    out = jax.block_until_ready(out)

    # reference check (plain JAX) -- matches the PyTorch module: x*std + mean[0]
    ref = x * std + mean[0]
    assert out.shape == (N, C, resol, resol)
    assert jnp.allclose(out, ref, atol=1e-6), "mismatch vs reference"

    print("KERNEL_OK")
</pallas_src>

<mosaic_0001>
module attributes {stable_mosaic.version = 11 : i64} {
  func.func @_normalize_kernel(%arg0: i32, %arg1: memref<2x768xf32, #tpu.memory_space<vmem>>, %arg2: memref<1x768xf32, #tpu.memory_space<vmem>>, %arg3: memref<1x768xf32, #tpu.memory_space<vmem>>, %arg4: memref<2x768xf32, #tpu.memory_space<vmem>>) attributes {dimension_semantics = [#tpu.dimension_semantics<parallel>], iteration_bounds = array<i64: 1>, scalar_prefetch = 0 : i64, scratch_operands = 0 : i64, tpu.core_type = #tpu.core_type<tc>, window_params = [{transform_indices = @transform_0, window_bounds = array<i64: 2, 768>}, {pipeline_mode = #tpu.pipeline_mode<synchronous>, transform_indices = @transform_1, window_bounds = array<i64: 1, 768>}, {pipeline_mode = #tpu.pipeline_mode<synchronous>, transform_indices = @transform_2, window_bounds = array<i64: 1, 768>}, {transform_indices = @transform_3, window_bounds = array<i64: 2, 768>}]} {
    %c0 = arith.constant 0 : index
    %c0_0 = arith.constant 0 : index
    %0 = vector.load %arg1[%c0, %c0_0] : memref<2x768xf32, #tpu.memory_space<vmem>>, vector<2x768xf32>
    %c0_1 = arith.constant 0 : index
    %c0_2 = arith.constant 0 : index
    %1 = vector.load %arg2[%c0_1, %c0_2] : memref<1x768xf32, #tpu.memory_space<vmem>>, vector<1x768xf32>
    %2 = vector.broadcast %1 : vector<1x768xf32> to vector<2x768xf32>
    %3 = arith.mulf %0, %2 : vector<2x768xf32>
    %c0_3 = arith.constant 0 : index
    %c0_4 = arith.constant 0 : index
    %4 = vector.load %arg3[%c0_3, %c0_4] : memref<1x768xf32, #tpu.memory_space<vmem>>, vector<1x768xf32>
    %5 = vector.broadcast %4 : vector<1x768xf32> to vector<2x768xf32>
    %6 = arith.addf %3, %5 : vector<2x768xf32>
    %c0_5 = arith.constant 0 : index
    %c0_6 = arith.constant 0 : index
    %7 = vector.load %arg4[%c0_5, %c0_6] : memref<2x768xf32, #tpu.memory_space<vmem>>, vector<2x768xf32>
    tpu.vector_store %arg4[%c0_5, %c0_6], %6 {strides = array<i32>} : memref<2x768xf32, #tpu.memory_space<vmem>>, vector<2x768xf32>,
    return
  }
  func.func @transform_0(%arg0: i32) -> (i32, i32) {
    %c0_i32 = arith.constant 0 : i32
    %c0_i32_0 = arith.constant 0 : i32
    return %arg0, %c0_i32 : i32, i32
  }
  func.func @transform_1(%arg0: i32) -> (i32, i32) {
    %c0_i32 = arith.constant 0 : i32
    %c0_i32_0 = arith.constant 0 : i32
    %c0_i32_1 = arith.constant 0 : i32
    return %c0_i32, %c0_i32_0 : i32, i32
  }
  func.func @transform_2(%arg0: i32) -> (i32, i32) {
    %c0_i32 = arith.constant 0 : i32
    %c0_i32_0 = arith.constant 0 : i32
    %c0_i32_1 = arith.constant 0 : i32
    return %c0_i32, %c0_i32_0 : i32, i32
  }
  func.func @transform_3(%arg0: i32) -> (i32, i32) {
    %c0_i32 = arith.constant 0 : i32
    %c0_i32_0 = arith.constant 0 : i32
    return %arg0, %c0_i32 : i32, i32
  }
}

</mosaic_0001>

<llo_original>
// kernel: tpu_custom_call.1
$region0: #{tpu_custom_call.1}
  #allocation0 [shape = 'u32[]', space=smem, size = 0x4, offset = 0x4, fixed_abs, tag = 'smem constant byte address 0x4 - core index']
  #allocation1 [shape = 'u32[72,128]{1,0:T(1,128)}', space=vmem, size = 0x9000, scoped, tag = 'internal scratch']
  %s0 = inlined_call_operand.hbm [shape: f32[2,768], index: 0, kind: input, shape index: {}]
  %s1 = inlined_call_operand.hbm [shape: f32[1,768], index: 1, kind: input, shape index: {}]
  %s2 = inlined_call_operand.hbm [shape: f32[1,768], index: 2, kind: input, shape index: {}]
  %s3 = inlined_call_operand.hbm [shape: f32[2,768], index: 3, kind: output, shape index: {}]
  %s4 = sld [smem:[#allocation0]]
  $region34: #{tpu_custom_call.1} parent=0
    _
  %s6 = ssub.s32 1, %s4
  %s7 = scalar_select 0, %s6, %s4
  $region1: #{tpu_custom_call.1} parent=0
    #allocation2 [shape = 'u8[6144]{0}', space=vmem, size = 0x1800, scoped, tag = 'input window, operand 0, single buffered']
    #allocation3 [shape = 's32[1]{0}', space=sflag, size = 0x4, scoped, tag = 'scoped memory for tpu_custom_call.1']
    #allocation4 [shape = 's32[1]{0}', space=sflag, size = 0x4, scoped, tag = 'scoped memory for tpu_custom_call.1']
    #allocation5 [shape = 'u8[3072]{0}', space=vmem, size = 0xc00, scoped, tag = 'input window, operand 1, single buffered']
    #allocation6 [shape = 's32[1]{0}', space=sflag, size = 0x4, scoped, tag = 'scoped memory for tpu_custom_call.1']
    #allocation7 [shape = 'u8[3072]{0}', space=vmem, size = 0xc00, scoped, tag = 'input window, operand 2, single buffered']
    #allocation8 [shape = 'u8[6144]{0}', space=vmem, size = 0x1800, scoped, tag = 'output window, operand 0, single buffered']
    %8 = vsyncpa [#allocation3], 0
    %9 = vsyncpa [#allocation6], 0
    %10 = vsyncpa [#allocation4], 0
    // Predicated region
    $region2: #{tpu_custom_call.1} parent=1 // pred_check
      _
    $region3: #{tpu_custom_call.1} parent=1 // pred_check_branch
      %12 = sbr.rel (0) target = $region5
    $region4: #{tpu_custom_call.1} parent=1 // pred_region
      %14 = vsyncadd [#allocation3], 0
      %s16 = sshll.u32 %s0, 4
      %s17 = int_to_ptr.hbm [resolvable:$true] %s16
      %s18 = sshll.u32 [#allocation2], 4
      %s19 = int_to_ptr.vmem [resolvable:$true] %s18
      %21 = dma.hbm_to_vmem [thread:$0]  %s17, 192, %s19, [#allocation3]
    $region5: #{tpu_custom_call.1} parent=1 // pred_fallthru
      _
    // Predicated region
    $region6: #{tpu_custom_call.1} parent=1 // pred_check
      _
    $region7: #{tpu_custom_call.1} parent=1 // pred_check_branch
      %23 = sbr.rel (0) target = $region9
    $region8: #{tpu_custom_call.1} parent=1 // pred_region
      %25 = vsyncadd [#allocation6], 0
      %s27 = sshll.u32 %s1, 4
      %s28 = int_to_ptr.hbm [resolvable:$true] %s27
      %s29 = sshll.u32 [#allocation5], 4
      %s30 = int_to_ptr.vmem [resolvable:$true] %s29
      %32 = dma.hbm_to_vmem [thread:$0]  %s28, 96, %s30, [#allocation6]
    $region9: #{tpu_custom_call.1} parent=1 // pred_fallthru
      _
    // Predicated region
    $region10: #{tpu_custom_call.1} parent=1 // pred_check
      _
    $region11: #{tpu_custom_call.1} parent=1 // pred_check_branch
      %34 = sbr.rel (0) target = $region13
    $region12: #{tpu_custom_call.1} parent=1 // pred_region
      %36 = vsyncadd [#allocation6], 0
      %s38 = sshll.u32 %s2, 4
      %s39 = int_to_ptr.hbm [resolvable:$true] %s38
      %s40 = sshll.u32 [#allocation7], 4
      %s41 = int_to_ptr.vmem [resolvable:$true] %s40
      %43 = dma.hbm_to_vmem [thread:$0]  %s39, 96, %s41, [#allocation6]
    $region13: #{tpu_custom_call.1} parent=1 // pred_fallthru
      _
    // Predicated region
    $region14: #{tpu_custom_call.1} parent=1 // pred_check
      _
    $region15: #{tpu_custom_call.1} parent=1 // pred_check_branch
      %45 = sbr.rel (0) target = $region17
    $region16: #{tpu_custom_call.1} parent=1 // pred_region
      %47 = dma.done [#allocation3], 192
    $region17: #{tpu_custom_call.1} parent=1 // pred_fallthru
      _
    // Predicated region
    $region18: #{tpu_custom_call.1} parent=1 // pred_check
      _
    $region19: #{tpu_custom_call.1} parent=1 // pred_check_branch
      %49 = sbr.rel (0) target = $region21
    $region20: #{tpu_custom_call.1} parent=1 // pred_region
      %51 = dma.done [#allocation6], 96
    $region21: #{tpu_custom_call.1} parent=1 // pred_fallthru
      _
    // Predicated region
    $region22: #{tpu_custom_call.1} parent=1 // pred_check
      _
    $region23: #{tpu_custom_call.1} parent=1 // pred_check_branch
      %53 = sbr.rel (0) target = $region25
    $region24: #{tpu_custom_call.1} parent=1 // pred_region
      %55 = dma.done [#allocation6], 96
    $region25: #{tpu_custom_call.1} parent=1 // pred_fallthru
      _
    %v56 = vld [vmem:[#allocation2] sm:$0xff]
    %v57 = vld [vmem:[#allocation2 + $0x8] sm:$0xf]
    %v58 = vld [vmem:[#allocation5] sm:$0x3f]
    %v60 = vperm.slane %v58, 0
    %v61 = vperm.slane %v58, 1
    %v62 = vperm.slane %v58, 2
    %v63 = vperm.slane %v58, 3
    %v64 = vperm.slane %v58, 4
    %v65 = vperm.slane %v58, 5
    %v66 = vrot.slane %v61, 6
    %v67 = vrot.slane %v62, 4
    %v68 = vrot.slane %v63, 2
    %v69 = vrot.slane %v65, 6
    %vm70 = vcmask 1041408
    %v71 = vsel %vm70, %v60, %v66
    %vm72 = vcmask 1045508
    %v73 = vsel %vm72, %v67, %v68
    %vm74 = vcmask 1043456
    %v75 = vsel %vm74, %v71, %v73
    %v76 = vsel %vm70, %v64, %v69
    %v79 = vmul.f32 %v56, %v75
    %v80 = vmul.f32 %v57, %v76
    %v81 = vld [vmem:[#allocation7] sm:$0x3f]
    %v83 = vperm.slane %v81, 0
    %v84 = vperm.slane %v81, 1
    %v85 = vperm.slane %v81, 2
    %v86 = vperm.slane %v81, 3
    %v87 = vperm.slane %v81, 4
    %v88 = vperm.slane %v81, 5
    %v89 = vrot.slane %v84, 6
    %v90 = vrot.slane %v85, 4
    %v91 = vrot.slane %v86, 2
    %v92 = vrot.slane %v88, 6
    %v93 = vsel %vm70, %v83, %v89
    %v94 = vsel %vm72, %v90, %v91
    %v95 = vsel %vm74, %v93, %v94
    %v96 = vsel %vm70, %v87, %v92
    %v99 = vadd.f32 %v79, %v95
    %v100 = vadd.f32 %v80, %v96
    %101 = vst [vmem:[#allocation8] sm:$0xff] %v99
    %102 = vst [vmem:[#allocation8 + $0x8] sm:$0xf] %v100
    // Predicated region
    $region26: #{tpu_custom_call.1} parent=1 // pred_check
      _
    $region27: #{tpu_custom_call.1} parent=1 // pred_check_branch
      %104 = sbr.rel (0) target = $region29
    $region28: #{tpu_custom_call.1} parent=1 // pred_region
      %106 = vsyncadd [#allocation4], 0
      %s108 = sshll.u32 [#allocation8], 4
      %s109 = int_to_ptr.vmem [resolvable:$true] %s108
      %s110 = sshll.u32 %s3, 4
      %s111 = int_to_ptr.hbm [resolvable:$true] %s110
      %113 = dma.vmem_to_hbm [thread:$0]  %s109, 192, %s111, [#allocation4]
    $region29: #{tpu_custom_call.1} parent=1 // pred_fallthru
      _
    // Predicated region
    $region30: #{tpu_custom_call.1} parent=1 // pred_check
      _
    $region31: #{tpu_custom_call.1} parent=1 // pred_check_branch
      %115 = sbr.rel (0) target = $region33
    $region32: #{tpu_custom_call.1} parent=1 // pred_region
      %117 = dma.done [#allocation4], 192
    $region33: #{tpu_custom_call.1} parent=1 // pred_fallthru
      _
    %118 = vsyncpa [#allocation3], 1
    %119 = vsyncpa [#allocation6], 1
    %120 = vsyncpa [#allocation4], 1

</llo_original>
